<compile_context>
chip_gen: v6e
topology: v6e:2x2x1
jax: 0.10.0
libtpu: 0.0.40
codegen_flags: <defaults>
</compile_context>

<pallas_src>
import functools

import jax
import jax.numpy as jnp
from jax.experimental import pallas as pl
from jax.experimental.pallas import tpu as pltpu


def _round_up(x, m):
    return ((x + m - 1) // m) * m


def _layer_norm(h, gamma, beta, eps=1e-5):
    # One-pass statistics with a clamp (ms - mu^2 can cancel / round < 0).
    mu = jnp.mean(h, axis=-1, keepdims=True)
    ms = jnp.mean(h * h, axis=-1, keepdims=True)
    var = jnp.maximum(ms - mu * mu, 0.0)
    return (h - mu) * jax.lax.rsqrt(var + eps) * gamma + beta


def _silu(x):
    # sigmoid(x) = 0.5 * (tanh(0.5 * x) + 1): a single EUP transcendental.
    return x * (0.5 * jnp.tanh(0.5 * x) + 0.5)


def critic_kernel(x_ref, w1_ref, ln1_ref, w2_ref, ln2_ref, w3_ref, b3_ref,
                  out_ref):
    # In-kernel bf16 cast of the input tile (hidden under the MXU).
    x = x_ref[...].astype(jnp.bfloat16)

    # Layer 1: bf16 matmul, f32 accumulate -> bias + LayerNorm + SiLU (f32).
    h = jnp.dot(x, w1_ref[...], preferred_element_type=jnp.float32)
    h = _silu(_layer_norm(h + ln1_ref[0:1, :], ln1_ref[1:2, :], ln1_ref[2:3, :]))

    # Layer 2: bf16 matmul, f32 accumulate -> bias + LayerNorm + SiLU (f32).
    h = jnp.dot(h.astype(jnp.bfloat16), w2_ref[...],
                preferred_element_type=jnp.float32)
    h = _silu(_layer_norm(h + ln2_ref[0:1, :], ln2_ref[1:2, :], ln2_ref[2:3, :]))

    # Value head, lane-dense: (1, H) x (tb, H)^T contracting H -> (1, tb).
    v = jax.lax.dot_general(
        w3_ref[...], h.astype(jnp.bfloat16),
        dimension_numbers=(((1,), (1,)), ((), ())),
        preferred_element_type=jnp.float32)
    out_ref[...] = (v + b3_ref[0, 0]).astype(out_ref.dtype)


def _resident_spec(shape):
    """Grid-invariant input: constant index_map, single VMEM buffer."""
    try:
        return pl.BlockSpec(shape, lambda i: (0, 0),
                            pipeline_mode=pl.Buffered(1))
    except (TypeError, AttributeError):
        # Older JAX without pipeline_mode / Buffered: default buffering.
        return pl.BlockSpec(shape, lambda i: (0, 0))


@functools.partial(jax.jit, static_argnames=("tile_b",))
def critic_forward(latent, kparams, *, tile_b=512):
    """latent: (B, latent_size) f32  ->  value: (B, 1) f32."""
    B, L = latent.shape
    H = kparams["w1"].shape[1]

    # Batch tile: multiple of 128 (lane-dense output / MXU-friendly sublanes),
    # capped by tile_b, and split into >= 2 grid steps when the batch allows
    # it (v7x dual TensorCore sharding of the "parallel" axis).
    tb = min(tile_b, _round_up(B, 128))
    if B >= 256 and pl.cdiv(B, tb) < 2:
        tb = _round_up(pl.cdiv(B, 2), 128)
    n_tiles = pl.cdiv(B, tb)
    pB = n_tiles * tb

    in_specs = [
        pl.BlockSpec((tb, L), lambda i: (i, 0)),          # x tile (pipelined)
        _resident_spec((L, H)),                           # w1 (bf16)
        _resident_spec((3, H)),                           # [b1; g1; be1] (f32)
        _resident_spec((H, H)),                           # w2 (bf16)
        _resident_spec((3, H)),                           # [b2; g2; be2] (f32)
        _resident_spec((1, H)),                           # w3 row (bf16)
        pl.BlockSpec(memory_space=pltpu.MemorySpace.SMEM),  # b3 scalar
    ]
    out_spec = pl.BlockSpec((1, tb), lambda i: (0, i))    # lane-dense output

    out = pl.pallas_call(
        critic_kernel,
        out_shape=jax.ShapeDtypeStruct((1, pB), jnp.float32),
        grid=(n_tiles,),
        in_specs=in_specs,
        out_specs=out_spec,
        compiler_params=pltpu.CompilerParams(
            dimension_semantics=("parallel",),
            vmem_limit_bytes=48 * 1024 * 1024,   # headroom under v7x's 64 MiB
        ),
    )(latent,
      kparams["w1"], kparams["ln1"],
      kparams["w2"], kparams["ln2"],
      kparams["w3"], kparams["b3"])

    return out[0, :B].reshape(B, 1)


def init_params(key, latent_size, hidden):
    """Plain f32 'module parameters'."""
    ks = jax.random.split(key, 3)

    def lin(k, fan_in, fan_out):
        scale = 1.0 / jnp.sqrt(fan_in)
        w = jax.random.uniform(k, (fan_in, fan_out), jnp.float32, -scale, scale)
        b = jnp.zeros((1, fan_out), jnp.float32)
        return w, b

    w1, b1 = lin(ks[0], latent_size, hidden)
    w2, b2 = lin(ks[1], hidden, hidden)
    w3, b3 = lin(ks[2], hidden, 1)
    ones = jnp.ones((1, hidden), jnp.float32)
    zeros = jnp.zeros((1, hidden), jnp.float32)
    return dict(w1=w1, b1=b1, g1=ones, be1=zeros,
                w2=w2, b2=b2, g2=ones, be2=zeros,
                w3=w3, b3=b3)


def prepare_params(p):
    """One-time, outside-jit packing: bf16 matmul weights, stacked LN vecs."""
    H = p["w1"].shape[1]
    return dict(
        w1=p["w1"].astype(jnp.bfloat16),
        w2=p["w2"].astype(jnp.bfloat16),
        w3=p["w3"].reshape(1, H).astype(jnp.bfloat16),
        ln1=jnp.concatenate([p["b1"], p["g1"], p["be1"]], axis=0),  # (3, H)
        ln2=jnp.concatenate([p["b2"], p["g2"], p["be2"]], axis=0),  # (3, H)
        b3=p["b3"].reshape(1, 1).astype(jnp.float32),
    )


def critic_ref_bf16(latent, p):
    """Same math path as the kernel (bf16 matmuls, f32 accumulate / LN)."""
    x = latent.astype(jnp.bfloat16)
    h = jnp.dot(x, p["w1"].astype(jnp.bfloat16),
                preferred_element_type=jnp.float32)
    h = _silu(_layer_norm(h + p["b1"], p["g1"], p["be1"]))
    h = jnp.dot(h.astype(jnp.bfloat16), p["w2"].astype(jnp.bfloat16),
                preferred_element_type=jnp.float32)
    h = _silu(_layer_norm(h + p["b2"], p["g2"], p["be2"]))
    v = jnp.dot(h.astype(jnp.bfloat16), p["w3"].astype(jnp.bfloat16),
                preferred_element_type=jnp.float32)
    return v + p["b3"]


def critic_ref_f32(latent, p):
    """Full-precision reference for the original (f32) module semantics."""
    h = _silu(_layer_norm(latent @ p["w1"] + p["b1"], p["g1"], p["be1"]))
    h = _silu(_layer_norm(h @ p["w2"] + p["b2"], p["g2"], p["be2"]))
    return h @ p["w3"] + p["b3"]


if __name__ == "__main__":
    B, LATENT, HIDDEN = 8, 32, 32
    key = jax.random.PRNGKey(0)
    k_x, k_p = jax.random.split(key)
    latent = jax.random.normal(k_x, (B, LATENT), jnp.float32)
    params = init_params(k_p, LATENT, HIDDEN)
    kparams = prepare_params(params)

    out = jax.block_until_ready(critic_forward(latent, kparams))
    assert out.shape == (B, 1), out.shape

    # Tight check vs. a reference that uses the same bf16-matmul path.
    ref_b = critic_ref_bf16(latent, params)
    assert jnp.allclose(out, ref_b, atol=2e-4, rtol=2e-4), (out, ref_b)

    # Loose check vs. the full f32 reference (bf16 matmul rounding only).
    ref_f = critic_ref_f32(latent, params)
    assert jnp.allclose(out, ref_f, atol=5e-2, rtol=5e-2), (out, ref_f)

    print("KERNEL_OK")
</pallas_src>

<mosaic_0001>
module attributes {stable_mosaic.version = 11 : i64} {
  func.func @critic_kernel(%arg0: i32, %arg1: memref<128x32xf32, #tpu.memory_space<vmem>>, %arg2: memref<32x32xbf16, #tpu.memory_space<vmem>>, %arg3: memref<3x32xf32, #tpu.memory_space<vmem>>, %arg4: memref<32x32xbf16, #tpu.memory_space<vmem>>, %arg5: memref<3x32xf32, #tpu.memory_space<vmem>>, %arg6: memref<1x32xbf16, #tpu.memory_space<vmem>>, %arg7: memref<1x1xf32, #tpu.memory_space<smem>>, %arg8: memref<1x128xf32, #tpu.memory_space<vmem>>) attributes {dimension_semantics = [#tpu.dimension_semantics<parallel>], iteration_bounds = array<i64: 1>, scalar_prefetch = 0 : i64, scratch_operands = 0 : i64, tpu.core_type = #tpu.core_type<tc>, window_params = [{transform_indices = @transform_0, window_bounds = array<i64: 128, 32>}, {pipeline_mode = #tpu.pipeline_mode<synchronous>, transform_indices = @transform_1, window_bounds = array<i64: 32, 32>}, {pipeline_mode = #tpu.pipeline_mode<synchronous>, transform_indices = @transform_2, window_bounds = array<i64: 3, 32>}, {pipeline_mode = #tpu.pipeline_mode<synchronous>, transform_indices = @transform_3, window_bounds = array<i64: 32, 32>}, {pipeline_mode = #tpu.pipeline_mode<synchronous>, transform_indices = @transform_4, window_bounds = array<i64: 3, 32>}, {pipeline_mode = #tpu.pipeline_mode<synchronous>, transform_indices = @transform_5, window_bounds = array<i64: 1, 32>}, {transform_indices = @transform_6, window_bounds = array<i64: 1, 1>}, {transform_indices = @transform_7, window_bounds = array<i64: 1, 128>}]} {
    %c0 = arith.constant 0 : index
    %c0_0 = arith.constant 0 : index
    %0 = vector.load %arg1[%c0, %c0_0] : memref<128x32xf32, #tpu.memory_space<vmem>>, vector<128x32xf32>
    %1 = arith.truncf %0 : vector<128x32xf32> to vector<128x32xbf16>
    %c0_1 = arith.constant 0 : index
    %c0_2 = arith.constant 0 : index
    %2 = vector.load %arg2[%c0_1, %c0_2] : memref<32x32xbf16, #tpu.memory_space<vmem>>, vector<32x32xbf16>
    %cst = arith.constant dense<0.000000e+00> : vector<128x32xf32>
    %3 = tpu.matmul %1, %2, %cst {dimension_numbers = #tpu.dot_dimension_numbers<[1], [0], [0], [1], [0, 0, 1, 1], [], []>} : vector<128x32xbf16>, vector<32x32xbf16>, vector<128x32xf32> -> vector<128x32xf32>
    %c0_3 = arith.constant 0 : index
    %c0_4 = arith.constant 0 : index
    %4 = vector.load %arg3[%c0_3, %c0_4] : memref<3x32xf32, #tpu.memory_space<vmem>>, vector<1x32xf32>
    %5 = vector.broadcast %4 : vector<1x32xf32> to vector<128x32xf32>
    %6 = arith.addf %3, %5 : vector<128x32xf32>
    %c1 = arith.constant 1 : index
    %c0_5 = arith.constant 0 : index
    %7 = vector.load %arg3[%c1, %c0_5] : memref<3x32xf32, #tpu.memory_space<vmem>>, vector<1x32xf32>
    %c2 = arith.constant 2 : index
    %c0_6 = arith.constant 0 : index
    %8 = vector.load %arg3[%c2, %c0_6] : memref<3x32xf32, #tpu.memory_space<vmem>>, vector<1x32xf32>
    %cst_7 = arith.constant dense<0.000000e+00> : vector<128xf32>
    %9 = vector.multi_reduction <add>, %6, %cst_7 [1] : vector<128x32xf32> to vector<128xf32>
    %10 = vector.shape_cast %9 : vector<128xf32> to vector<128x1xf32>
    %cst_8 = arith.constant 3.200000e+01 : f32
    %11 = vector.broadcast %cst_8 : f32 to vector<128x1xf32>
    %12 = arith.divf %10, %11 : vector<128x1xf32>
    %13 = arith.mulf %6, %6 : vector<128x32xf32>
    %cst_9 = arith.constant dense<0.000000e+00> : vector<128xf32>
    %14 = vector.multi_reduction <add>, %13, %cst_9 [1] : vector<128x32xf32> to vector<128xf32>
    %15 = vector.shape_cast %14 : vector<128xf32> to vector<128x1xf32>
    %cst_10 = arith.constant 3.200000e+01 : f32
    %16 = vector.broadcast %cst_10 : f32 to vector<128x1xf32>
    %17 = arith.divf %15, %16 : vector<128x1xf32>
    %18 = arith.mulf %12, %12 : vector<128x1xf32>
    %19 = arith.subf %17, %18 : vector<128x1xf32>
    %cst_11 = arith.constant 0.000000e+00 : f32
    %20 = vector.broadcast %cst_11 : f32 to vector<128x1xf32>
    %21 = arith.maximumf %19, %20 : vector<128x1xf32>
    %22 = vector.broadcast %12 : vector<128x1xf32> to vector<128x32xf32>
    %23 = arith.subf %6, %22 : vector<128x32xf32>
    %cst_12 = arith.constant 9.99999974E-6 : f32
    %24 = vector.broadcast %cst_12 : f32 to vector<128x1xf32>
    %25 = arith.addf %21, %24 : vector<128x1xf32>
    %26 = math.rsqrt %25 : vector<128x1xf32>
    %27 = vector.broadcast %26 : vector<128x1xf32> to vector<128x32xf32>
    %28 = arith.mulf %23, %27 : vector<128x32xf32>
    %29 = vector.broadcast %7 : vector<1x32xf32> to vector<128x32xf32>
    %30 = arith.mulf %28, %29 : vector<128x32xf32>
    %31 = vector.broadcast %8 : vector<1x32xf32> to vector<128x32xf32>
    %32 = arith.addf %30, %31 : vector<128x32xf32>
    %cst_13 = arith.constant 5.000000e-01 : f32
    %33 = vector.broadcast %cst_13 : f32 to vector<128x32xf32>
    %34 = arith.mulf %33, %32 : vector<128x32xf32>
    %35 = math.tanh %34 : vector<128x32xf32>
    %cst_14 = arith.constant 5.000000e-01 : f32
    %36 = vector.broadcast %cst_14 : f32 to vector<128x32xf32>
    %37 = arith.mulf %36, %35 : vector<128x32xf32>
    %cst_15 = arith.constant 5.000000e-01 : f32
    %38 = vector.broadcast %cst_15 : f32 to vector<128x32xf32>
    %39 = arith.addf %37, %38 : vector<128x32xf32>
    %40 = arith.mulf %32, %39 : vector<128x32xf32>
    %41 = arith.truncf %40 : vector<128x32xf32> to vector<128x32xbf16>
    %c0_16 = arith.constant 0 : index
    %c0_17 = arith.constant 0 : index
    %42 = vector.load %arg4[%c0_16, %c0_17] : memref<32x32xbf16, #tpu.memory_space<vmem>>, vector<32x32xbf16>
    %cst_18 = arith.constant dense<0.000000e+00> : vector<128x32xf32>
    %43 = tpu.matmul %41, %42, %cst_18 {dimension_numbers = #tpu.dot_dimension_numbers<[1], [0], [0], [1], [0, 0, 1, 1], [], []>} : vector<128x32xbf16>, vector<32x32xbf16>, vector<128x32xf32> -> vector<128x32xf32>
    %c0_19 = arith.constant 0 : index
    %c0_20 = arith.constant 0 : index
    %44 = vector.load %arg5[%c0_19, %c0_20] : memref<3x32xf32, #tpu.memory_space<vmem>>, vector<1x32xf32>
    %45 = vector.broadcast %44 : vector<1x32xf32> to vector<128x32xf32>
    %46 = arith.addf %43, %45 : vector<128x32xf32>
    %c1_21 = arith.constant 1 : index
    %c0_22 = arith.constant 0 : index
    %47 = vector.load %arg5[%c1_21, %c0_22] : memref<3x32xf32, #tpu.memory_space<vmem>>, vector<1x32xf32>
    %c2_23 = arith.constant 2 : index
    %c0_24 = arith.constant 0 : index
    %48 = vector.load %arg5[%c2_23, %c0_24] : memref<3x32xf32, #tpu.memory_space<vmem>>, vector<1x32xf32>
    %cst_25 = arith.constant dense<0.000000e+00> : vector<128xf32>
    %49 = vector.multi_reduction <add>, %46, %cst_25 [1] : vector<128x32xf32> to vector<128xf32>
    %50 = vector.shape_cast %49 : vector<128xf32> to vector<128x1xf32>
    %cst_26 = arith.constant 3.200000e+01 : f32
    %51 = vector.broadcast %cst_26 : f32 to vector<128x1xf32>
    %52 = arith.divf %50, %51 : vector<128x1xf32>
    %53 = arith.mulf %46, %46 : vector<128x32xf32>
    %cst_27 = arith.constant dense<0.000000e+00> : vector<128xf32>
    %54 = vector.multi_reduction <add>, %53, %cst_27 [1] : vector<128x32xf32> to vector<128xf32>
    %55 = vector.shape_cast %54 : vector<128xf32> to vector<128x1xf32>
    %cst_28 = arith.constant 3.200000e+01 : f32
    %56 = vector.broadcast %cst_28 : f32 to vector<128x1xf32>
    %57 = arith.divf %55, %56 : vector<128x1xf32>
    %58 = arith.mulf %52, %52 : vector<128x1xf32>
    %59 = arith.subf %57, %58 : vector<128x1xf32>
    %cst_29 = arith.constant 0.000000e+00 : f32
    %60 = vector.broadcast %cst_29 : f32 to vector<128x1xf32>
    %61 = arith.maximumf %59, %60 : vector<128x1xf32>
    %62 = vector.broadcast %52 : vector<128x1xf32> to vector<128x32xf32>
    %63 = arith.subf %46, %62 : vector<128x32xf32>
    %cst_30 = arith.constant 9.99999974E-6 : f32
    %64 = vector.broadcast %cst_30 : f32 to vector<128x1xf32>
    %65 = arith.addf %61, %64 : vector<128x1xf32>
    %66 = math.rsqrt %65 : vector<128x1xf32>
    %67 = vector.broadcast %66 : vector<128x1xf32> to vector<128x32xf32>
    %68 = arith.mulf %63, %67 : vector<128x32xf32>
    %69 = vector.broadcast %47 : vector<1x32xf32> to vector<128x32xf32>
    %70 = arith.mulf %68, %69 : vector<128x32xf32>
    %71 = vector.broadcast %48 : vector<1x32xf32> to vector<128x32xf32>
    %72 = arith.addf %70, %71 : vector<128x32xf32>
    %cst_31 = arith.constant 5.000000e-01 : f32
    %73 = vector.broadcast %cst_31 : f32 to vector<128x32xf32>
    %74 = arith.mulf %73, %72 : vector<128x32xf32>
    %75 = math.tanh %74 : vector<128x32xf32>
    %cst_32 = arith.constant 5.000000e-01 : f32
    %76 = vector.broadcast %cst_32 : f32 to vector<128x32xf32>
    %77 = arith.mulf %76, %75 : vector<128x32xf32>
    %cst_33 = arith.constant 5.000000e-01 : f32
    %78 = vector.broadcast %cst_33 : f32 to vector<128x32xf32>
    %79 = arith.addf %77, %78 : vector<128x32xf32>
    %80 = arith.mulf %72, %79 : vector<128x32xf32>
    %c0_34 = arith.constant 0 : index
    %c0_35 = arith.constant 0 : index
    %81 = vector.load %arg6[%c0_34, %c0_35] : memref<1x32xbf16, #tpu.memory_space<vmem>>, vector<1x32xbf16>
    %82 = arith.truncf %80 : vector<128x32xf32> to vector<128x32xbf16>
    %cst_36 = arith.constant dense<0.000000e+00> : vector<1x128xf32>
    %83 = tpu.matmul %81, %82, %cst_36 {dimension_numbers = #tpu.dot_dimension_numbers<[1], [1], [0], [0], [0, 0, 1, 0], [], []>} : vector<1x32xbf16>, vector<128x32xbf16>, vector<1x128xf32> -> vector<1x128xf32>
    %c0_37 = arith.constant 0 : index
    %c0_38 = arith.constant 0 : index
    %84 = memref.load %arg7[%c0_37, %c0_38] : memref<1x1xf32, #tpu.memory_space<smem>>
    %85 = vector.broadcast %84 : f32 to vector<1x128xf32>
    %86 = arith.addf %83, %85 : vector<1x128xf32>
    %c0_39 = arith.constant 0 : index
    %c0_40 = arith.constant 0 : index
    %87 = vector.load %arg8[%c0_39, %c0_40] : memref<1x128xf32, #tpu.memory_space<vmem>>, vector<1x128xf32>
    tpu.vector_store %arg8[%c0_39, %c0_40], %86 {strides = array<i32>} : memref<1x128xf32, #tpu.memory_space<vmem>>, vector<1x128xf32>,
    return
  }
  func.func @transform_0(%arg0: i32) -> (i32, i32) {
    %c0_i32 = arith.constant 0 : i32
    %c0_i32_0 = arith.constant 0 : i32
    return %arg0, %c0_i32 : i32, i32
  }
  func.func @transform_1(%arg0: i32) -> (i32, i32) {
    %c0_i32 = arith.constant 0 : i32
    %c0_i32_0 = arith.constant 0 : i32
    %c0_i32_1 = arith.constant 0 : i32
    return %c0_i32, %c0_i32_0 : i32, i32
  }
  func.func @transform_2(%arg0: i32) -> (i32, i32) {
    %c0_i32 = arith.constant 0 : i32
    %c0_i32_0 = arith.constant 0 : i32
    %c0_i32_1 = arith.constant 0 : i32
    return %c0_i32, %c0_i32_0 : i32, i32
  }
  func.func @transform_3(%arg0: i32) -> (i32, i32) {
    %c0_i32 = arith.constant 0 : i32
    %c0_i32_0 = arith.constant 0 : i32
    %c0_i32_1 = arith.constant 0 : i32
    return %c0_i32, %c0_i32_0 : i32, i32
  }
  func.func @transform_4(%arg0: i32) -> (i32, i32) {
    %c0_i32 = arith.constant 0 : i32
    %c0_i32_0 = arith.constant 0 : i32
    %c0_i32_1 = arith.constant 0 : i32
    return %c0_i32, %c0_i32_0 : i32, i32
  }
  func.func @transform_5(%arg0: i32) -> (i32, i32) {
    %c0_i32 = arith.constant 0 : i32
    %c0_i32_0 = arith.constant 0 : i32
    %c0_i32_1 = arith.constant 0 : i32
    return %c0_i32, %c0_i32_0 : i32, i32
  }
  func.func @transform_6(%arg0: i32) -> (i32, i32) {
    %c0_i32 = arith.constant 0 : i32
    %c0_i32_0 = arith.constant 0 : i32
    %c0_i32_1 = arith.constant 0 : i32
    return %c0_i32, %c0_i32_0 : i32, i32
  }
  func.func @transform_7(%arg0: i32) -> (i32, i32) {
    %c0_i32 = arith.constant 0 : i32
    %c0_i32_0 = arith.constant 0 : i32
    return %c0_i32, %arg0 : i32, i32
  }
}

</mosaic_0001>

<llo_original>
// kernel: critic_forward.1
$region0: #{critic_forward.1}
  #allocation0 [shape = 'u32[]', space=smem, size = 0x4, offset = 0x4, fixed_abs, tag = 'smem constant byte address 0x4 - core index']
  #allocation1 [shape = 'u32[144,128]{1,0:T(1,128)}', space=vmem, size = 0x12000, scoped, tag = 'internal scratch']
  #allocation2 [shape = 'f32[1,1]{1,0:T(1,128)S(6)}', space=smem, size = 0x200, scoped, tag = 'scoped memory for critic_forward.1']
  %s0 = inlined_call_operand.hbm [shape: f32[8,32], index: 0, kind: input, shape index: {}]
  %s1 = inlined_call_operand.hbm [shape: bf16[32,32], index: 1, kind: input, shape index: {}]
  %s2 = inlined_call_operand.hbm [shape: f32[3,32], index: 2, kind: input, shape index: {}]
  %s3 = inlined_call_operand.hbm [shape: bf16[32,32], index: 3, kind: input, shape index: {}]
  %s4 = inlined_call_operand.vmem [shape: f32[3,32], index: 4, kind: input, shape index: {}]
  %s5 = inlined_call_operand.vmem [shape: bf16[1,32], index: 5, kind: input, shape index: {}]
  %s6 = inlined_call_operand.<no memory space> [shape: f32[1,1], index: 6, kind: input, shape index: {}]
  %s7 = inlined_call_operand.vmem [shape: f32[1,128], index: 7, kind: output, shape index: {}]
  %s8 = sld [smem:[#allocation0]]
  $region54: #{critic_forward.1} parent=0
    _
  %s10 = ssub.s32 1, %s8
  %s11 = scalar_select 0, %s10, %s8
  %12 = sst [smem:[#allocation2]] %s6
  $region1: #{critic_forward.1} parent=0
    #allocation3 [shape = 'u8[65536]{0}', space=vmem, size = 0x10000, scoped, tag = 'input window, operand 0, single buffered']
    #allocation4 [shape = 's32[1]{0}', space=sflag, size = 0x4, scoped, tag = 'scoped memory for critic_forward.1']
    #allocation5 [shape = 'u8[8192]{0}', space=vmem, size = 0x2000, scoped, tag = 'input window, operand 1, single buffered']
    #allocation6 [shape = 's32[1]{0}', space=sflag, size = 0x4, scoped, tag = 'scoped memory for critic_forward.1']
    #allocation7 [shape = 'u8[2048]{0}', space=vmem, size = 0x800, scoped, tag = 'input window, operand 2, single buffered']
    #allocation8 [shape = 'u8[8192]{0}', space=vmem, size = 0x2000, scoped, tag = 'input window, operand 3, single buffered']
    #allocation9 [shape = 's32[1]{0}', space=sflag, size = 0x4, scoped, tag = 'scoped memory for critic_forward.1']
    %13 = vsyncpa [#allocation4], 0
    %14 = vsyncpa [#allocation6], 0
    %15 = vsyncpa [#allocation9], 0
    // Predicated region
    $region2: #{critic_forward.1} parent=1 // pred_check
      _
    $region3: #{critic_forward.1} parent=1 // pred_check_branch
      %17 = sbr.rel (0) target = $region5
    $region4: #{critic_forward.1} parent=1 // pred_region
      %s19 = ssub.s32 2048, 128
      %20 = vsyncadd [#allocation4], %s19
      %s21 = sshll.u32 [#allocation3], 4
      %s22 = int_to_ptr.vmem [resolvable:$true] %s21
      %27 = dma.hbm_to_vmem [thread:$0]  %s0, 128, %s22, [#allocation4], 128, 128, 8
    $region5: #{critic_forward.1} parent=1 // pred_fallthru
      _
    // Predicated region
    $region6: #{critic_forward.1} parent=1 // pred_check
      _
    $region7: #{critic_forward.1} parent=1 // pred_check_branch
      %29 = sbr.rel (0) target = $region9
    $region8: #{critic_forward.1} parent=1 // pred_region
      %s31 = ssub.s32 256, 256
      %32 = vsyncadd [#allocation6], %s31
      %s33 = sshll.u32 [#allocation5], 4
      %s34 = int_to_ptr.vmem [resolvable:$true] %s33
      %39 = dma.hbm_to_vmem [thread:$0]  %s1, 256, %s34, [#allocation6], 64, 64, 4
    $region9: #{critic_forward.1} parent=1 // pred_fallthru
      _
    // Predicated region
    $region10: #{critic_forward.1} parent=1 // pred_check
      _
    $region11: #{critic_forward.1} parent=1 // pred_check_branch
      %41 = sbr.rel (0) target = $region13
    $region12: #{critic_forward.1} parent=1 // pred_region
      %s43 = ssub.s32 64, 64
      %44 = vsyncadd [#allocation6], %s43
      %s46 = sshll.u32 [#allocation7], 4
      %s47 = int_to_ptr.vmem [resolvable:$true] %s46
      %49 = dma.hbm_to_vmem [thread:$0]  %s2, 64, %s47, [#allocation6]
    $region13: #{critic_forward.1} parent=1 // pred_fallthru
      _
    // Predicated region
    $region14: #{critic_forward.1} parent=1 // pred_check
      _
    $region15: #{critic_forward.1} parent=1 // pred_check_branch
      %51 = sbr.rel (0) target = $region17
    $region16: #{critic_forward.1} parent=1 // pred_region
      %s53 = ssub.s32 256, 256
      %54 = vsyncadd [#allocation9], %s53
      %s55 = sshll.u32 [#allocation8], 4
      %s56 = int_to_ptr.vmem [resolvable:$true] %s55
      %61 = dma.hbm_to_vmem [thread:$0]  %s3, 256, %s56, [#allocation9], 64, 64, 4
    $region17: #{critic_forward.1} parent=1 // pred_fallthru
      _
    // Predicated region
    $region18: #{critic_forward.1} parent=1 // pred_check
      _
    $region19: #{critic_forward.1} parent=1 // pred_check_branch
      %63 = sbr.rel (0) target = $region21
    $region20: #{critic_forward.1} parent=1 // pred_region
      _
    $region21: #{critic_forward.1} parent=1 // pred_fallthru
      _
    // Predicated region
    $region22: #{critic_forward.1} parent=1 // pred_check
      _
    $region23: #{critic_forward.1} parent=1 // pred_check_branch
      %65 = sbr.rel (0) target = $region25
    $region24: #{critic_forward.1} parent=1 // pred_region
      _
    $region25: #{critic_forward.1} parent=1 // pred_fallthru
      _
    // Predicated region
    $region26: #{critic_forward.1} parent=1 // pred_check
      _
    $region27: #{critic_forward.1} parent=1 // pred_check_branch
      %67 = sbr.rel (0) target = $region29
    $region28: #{critic_forward.1} parent=1 // pred_region
      _
    $region29: #{critic_forward.1} parent=1 // pred_fallthru
      _
    // Predicated region
    $region30: #{critic_forward.1} parent=1 // pred_check
      _
    $region31: #{critic_forward.1} parent=1 // pred_check_branch
      %69 = sbr.rel (0) target = $region33
    $region32: #{critic_forward.1} parent=1 // pred_region
      %70 = dma.done [#allocation4], 2048
    $region33: #{critic_forward.1} parent=1 // pred_fallthru
      _
    // Predicated region
    $region34: #{critic_forward.1} parent=1 // pred_check
      _
    $region35: #{critic_forward.1} parent=1 // pred_check_branch
      %72 = sbr.rel (0) target = $region37
    $region36: #{critic_forward.1} parent=1 // pred_region
      %73 = dma.done [#allocation6], 256
    $region37: #{critic_forward.1} parent=1 // pred_fallthru
      _
    // Predicated region
    $region38: #{critic_forward.1} parent=1 // pred_check
      _
    $region39: #{critic_forward.1} parent=1 // pred_check_branch
      %75 = sbr.rel (0) target = $region41
    $region40: #{critic_forward.1} parent=1 // pred_region
      %76 = dma.done [#allocation6], 64
    $region41: #{critic_forward.1} parent=1 // pred_fallthru
      _
    // Predicated region
    $region42: #{critic_forward.1} parent=1 // pred_check
      _
    $region43: #{critic_forward.1} parent=1 // pred_check_branch
      %78 = sbr.rel (0) target = $region45
    $region44: #{critic_forward.1} parent=1 // pred_region
      %79 = dma.done [#allocation9], 256
    $region45: #{critic_forward.1} parent=1 // pred_fallthru
      _
    %v81 = vld [vmem:[#allocation3] sm:$0xff]
    %v82 = vld [vmem:[#allocation3 + $0x8] sm:$0xff]
    %v83 = vld [vmem:[#allocation3 + $0x10] sm:$0xff]
    %v84 = vld [vmem:[#allocation3 + $0x18] sm:$0xff]
    %v85 = vld [vmem:[#allocation3 + $0x20] sm:$0xff]
    %v86 = vld [vmem:[#allocation3 + $0x28] sm:$0xff]
    %v87 = vld [vmem:[#allocation3 + $0x30] sm:$0xff]
    %v88 = vld [vmem:[#allocation3 + $0x38] sm:$0xff]
    %v89 = vld [vmem:[#allocation3 + $0x40] sm:$0xff]
    %v90 = vld [vmem:[#allocation3 + $0x48] sm:$0xff]
    %v91 = vld [vmem:[#allocation3 + $0x50] sm:$0xff]
    %v92 = vld [vmem:[#allocation3 + $0x58] sm:$0xff]
    %v93 = vld [vmem:[#allocation3 + $0x60] sm:$0xff]
    %v94 = vld [vmem:[#allocation3 + $0x68] sm:$0xff]
    %v95 = vld [vmem:[#allocation3 + $0x70] sm:$0xff]
    %v96 = vld [vmem:[#allocation3 + $0x78] sm:$0xff]
    %v97 = vpack.c.bf16 %v82, %v81
    %v98 = vpack.c.bf16 %v84, %v83
    %v99 = vpack.c.bf16 %v86, %v85
    %v100 = vpack.c.bf16 %v88, %v87
    %v101 = vpack.c.bf16 %v90, %v89
    %v102 = vpack.c.bf16 %v92, %v91
    %v103 = vpack.c.bf16 %v94, %v93
    %v104 = vpack.c.bf16 %v96, %v95
    %v105 = vld [vmem:[#allocation5] sm:$0xf]
    %v106 = vld [vmem:[#allocation5 + $0x4] sm:$0xf]
    %v107 = vld [vmem:[#allocation5 + $0x8] sm:$0xf]
    %v108 = vld [vmem:[#allocation5 + $0xc] sm:$0xf]
    %v109 = vld [vmem:[#allocation7] sm:$0x1]
    %v110 = vlaneseq
    %v111 = vshrl.u32 %v110, 7
    %v112 = vsub.s32 0, %v111
    %v113 = vrot.slane %v109, %v112
    %v118 = vunpack.c.l.b16 %v105
    %v119 = vunpack.c.l.b16 %v106
    %v120 = vunpack.c.l.b16 %v107
    %v121 = vunpack.c.l.b16 %v108
    %v122 = vpack.c.b16 %v119, %v118
    %v123 = vpack.c.b16 %v121, %v120
    %vm126 = vcmask 261120
    %v128 = vsel %vm126, %v97, 0
    %v131 = vsel %vm126, %v98, 0
    %v134 = vsel %vm126, %v99, 0
    %v137 = vsel %vm126, %v100, 0
    %v140 = vsel %vm126, %v101, 0
    %v143 = vsel %vm126, %v102, 0
    %v146 = vsel %vm126, %v103, 0
    %v149 = vsel %vm126, %v104, 0
    %151 = vmatprep.subr.bf16.mxu0 0
    %152 = vmatpush1.bf16.msra.mxu0 0
    %153 = vmatprep.subr.bf16.mxu0 0
    %154 = vmatpush1.bf16.msra.mxu0 0
    %155 = vmatprep.subr.bf16.mxu0 0
    %156 = vmatpush1.bf16.msra.mxu0 0
    %157 = vmatprep.subr.bf16.mxu0 0
    %158 = vmatpush1.bf16.msra.mxu0 0
    %159 = vmatprep.subr.bf16.mxu0 0
    %160 = vmatpush1.bf16.msra.mxu0 0
    %161 = vmatprep.subr.bf16.mxu0 0
    %162 = vmatpush1.bf16.msra.mxu0 0
    %163 = vmatprep.subr.bf16.mxu0 0
    %164 = vmatpush1.bf16.msra.mxu0 %v123
    %165 = vmatprep.subr.bf16.mxu0 0
    %166 = vmatpush1.bf16.msra.mxu0 %v122
    %167 = vmatprep.subr.bf16.mxu0 0
    %168 = vmatpush2.bf16.msra.mxu0 0
    %169 = vmatprep.subr.bf16.mxu0 0
    %170 = vmatpush2.bf16.msra.mxu0 0
    %171 = vmatprep.subr.bf16.mxu0 0
    %172 = vmatpush2.bf16.msra.mxu0 0
    %173 = vmatprep.subr.bf16.mxu0 0
    %174 = vmatpush2.bf16.msra.mxu0 0
    %175 = vmatprep.subr.bf16.mxu0 0
    %176 = vmatpush2.bf16.msra.mxu0 0
    %177 = vmatprep.subr.bf16.mxu0 0
    %178 = vmatpush2.bf16.msra.mxu0 0
    %179 = vmatprep.subr.bf16.mxu0 0
    %180 = vmatpush2.bf16.msra.mxu0 0
    %181 = vmatprep.subr.bf16.mxu0 0
    %182 = vmatpush2.bf16.msra.mxu0 0
    %183 = vmatprep.mubr.bf16.mxu0 0
    %184 = vmatmul.mubr.bf16.gmra.mxu0 %v128
    %v185 = vpop.f32.mrf.mxu0
    %v186 = vadd.f32 %v113, %v185
    %v187 = vpop.f32.mrf.mxu0
    %v188 = vpop.f32.mrf.mxu0
    %v189 = vadd.f32 %v113, %v188
    %v190 = vpop.f32.mrf.mxu0
    %191 = vmatprep.mubr.bf16.mxu0 0
    %192 = vmatmul.mubr.bf16.gmra.mxu0 %v131
    %v193 = vpop.f32.mrf.mxu0
    %v194 = vadd.f32 %v113, %v193
    %v195 = vpop.f32.mrf.mxu0
    %v196 = vpop.f32.mrf.mxu0
    %v197 = vadd.f32 %v113, %v196
    %v198 = vpop.f32.mrf.mxu0
    %199 = vmatprep.mubr.bf16.mxu0 0
    %200 = vmatmul.mubr.bf16.gmra.mxu0 %v134
    %v201 = vpop.f32.mrf.mxu0
    %v202 = vadd.f32 %v113, %v201
    %v203 = vpop.f32.mrf.mxu0
    %v204 = vpop.f32.mrf.mxu0
    %v205 = vadd.f32 %v113, %v204
    %v206 = vpop.f32.mrf.mxu0
    %207 = vmatprep.mubr.bf16.mxu0 0
    %208 = vmatmul.mubr.bf16.gmra.mxu0 %v137
    %v209 = vpop.f32.mrf.mxu0
    %v210 = vadd.f32 %v113, %v209
    %v211 = vpop.f32.mrf.mxu0
    %v212 = vpop.f32.mrf.mxu0
    %v213 = vadd.f32 %v113, %v212
    %v214 = vpop.f32.mrf.mxu0
    %215 = vmatprep.mubr.bf16.mxu0 0
    %216 = vmatmul.mubr.bf16.gmra.mxu0 %v140
    %v217 = vpop.f32.mrf.mxu0
    %v218 = vadd.f32 %v113, %v217
    %v219 = vpop.f32.mrf.mxu0
    %v220 = vpop.f32.mrf.mxu0
    %v221 = vadd.f32 %v113, %v220
    %v222 = vpop.f32.mrf.mxu0
    %223 = vmatprep.mubr.bf16.mxu0 0
    %224 = vmatmul.mubr.bf16.gmra.mxu0 %v143
    %v225 = vpop.f32.mrf.mxu0
    %v226 = vadd.f32 %v113, %v225
    %v227 = vpop.f32.mrf.mxu0
    %v228 = vpop.f32.mrf.mxu0
    %v229 = vadd.f32 %v113, %v228
    %v230 = vpop.f32.mrf.mxu0
    %231 = vmatprep.mubr.bf16.mxu0 0
    %232 = vmatmul.mubr.bf16.gmra.mxu0 %v146
    %v233 = vpop.f32.mrf.mxu0
    %v234 = vadd.f32 %v113, %v233
    %v235 = vpop.f32.mrf.mxu0
    %v236 = vpop.f32.mrf.mxu0
    %v237 = vadd.f32 %v113, %v236
    %v238 = vpop.f32.mrf.mxu0
    %239 = vmatprep.mubr.bf16.mxu0 0
    %240 = vmatmul.mubr.bf16.gmra.mxu0 %v149
    %v241 = vpop.f32.mrf.mxu0
    %v242 = vadd.f32 %v113, %v241
    %v243 = vpop.f32.mrf.mxu0
    %v244 = vpop.f32.mrf.mxu0
    %v245 = vadd.f32 %v113, %v244
    %v246 = vpop.f32.mrf.mxu0
    %247 = vdwg.mxu0
    %v248 = vld [vmem:[#allocation7 + $0x1] sm:$0x1]
    %v249 = vld [vmem:[#allocation7 + $0x2] sm:$0x1]
    %v250 = vsel %vm126, %v186, 0.0
    %251 = vadd.xlane.f32.xlu0 %v250
    %v252 = vpop.xlane.xlu0 %251
    %v253 = vsel %vm126, %v189, 0.0
    %254 = vadd.xlane.f32.xlu0 %v253
    %v255 = vpop.xlane.xlu0 %254
    %v256 = vsel %vm126, %v194, 0.0
    %257 = vadd.xlane.f32.xlu0 %v256
    %v258 = vpop.xlane.xlu0 %257
    %v259 = vsel %vm126, %v197, 0.0
    %260 = vadd.xlane.f32.xlu0 %v259
    %v261 = vpop.xlane.xlu0 %260
    %v262 = vsel %vm126, %v202, 0.0
    %263 = vadd.xlane.f32.xlu0 %v262
    %v264 = vpop.xlane.xlu0 %263
    %v265 = vsel %vm126, %v205, 0.0
    %266 = vadd.xlane.f32.xlu0 %v265
    %v267 = vpop.xlane.xlu0 %266
    %v268 = vsel %vm126, %v210, 0.0
    %269 = vadd.xlane.f32.xlu0 %v268
    %v270 = vpop.xlane.xlu0 %269
    %v271 = vsel %vm126, %v213, 0.0
    %272 = vadd.xlane.f32.xlu0 %v271
    %v273 = vpop.xlane.xlu0 %272
    %v274 = vsel %vm126, %v218, 0.0
    %275 = vadd.xlane.f32.xlu0 %v274
    %v276 = vpop.xlane.xlu0 %275
    %v277 = vsel %vm126, %v221, 0.0
    %278 = vadd.xlane.f32.xlu0 %v277
    %v279 = vpop.xlane.xlu0 %278
    %v280 = vsel %vm126, %v226, 0.0
    %281 = vadd.xlane.f32.xlu0 %v280
    %v282 = vpop.xlane.xlu0 %281
    %v283 = vsel %vm126, %v229, 0.0
    %284 = vadd.xlane.f32.xlu0 %v283
    %v285 = vpop.xlane.xlu0 %284
    %v286 = vsel %vm126, %v234, 0.0
    %287 = vadd.xlane.f32.xlu0 %v286
    %v288 = vpop.xlane.xlu0 %287
    %v289 = vsel %vm126, %v237, 0.0
    %290 = vadd.xlane.f32.xlu0 %v289
    %v291 = vpop.xlane.xlu0 %290
    %v292 = vsel %vm126, %v242, 0.0
    %293 = vadd.xlane.f32.xlu0 %v292
    %v294 = vpop.xlane.xlu0 %293
    %v295 = vsel %vm126, %v245, 0.0
    %296 = vadd.xlane.f32.xlu0 %v295
    %v297 = vpop.xlane.xlu0 %296
    %v298 = vrcp.pop 32.0
    %v299 = vmul.f32 %v252, %v298
    %v300 = vmul.f32 %v255, %v298
    %v301 = vmul.f32 %v258, %v298
    %v302 = vmul.f32 %v261, %v298
    %v303 = vmul.f32 %v264, %v298
    %v304 = vmul.f32 %v267, %v298
    %v305 = vmul.f32 %v270, %v298
    %v306 = vmul.f32 %v273, %v298
    %v307 = vmul.f32 %v276, %v298
    %v308 = vmul.f32 %v279, %v298
    %v309 = vmul.f32 %v282, %v298
    %v310 = vmul.f32 %v285, %v298
    %v311 = vmul.f32 %v288, %v298
    %v312 = vmul.f32 %v291, %v298
    %v313 = vmul.f32 %v294, %v298
    %v314 = vmul.f32 %v297, %v298
    %v315 = vmul.f32 %v186, %v186
    %v316 = vmul.f32 %v189, %v189
    %v317 = vmul.f32 %v194, %v194
    %v318 = vmul.f32 %v197, %v197
    %v319 = vmul.f32 %v202, %v202
    %v320 = vmul.f32 %v205, %v205
    %v321 = vmul.f32 %v210, %v210
    %v322 = vmul.f32 %v213, %v213
    %v323 = vmul.f32 %v218, %v218
    %v324 = vmul.f32 %v221, %v221
    %v325 = vmul.f32 %v226, %v226
    %v326 = vmul.f32 %v229, %v229
    %v327 = vmul.f32 %v234, %v234
    %v328 = vmul.f32 %v237, %v237
    %v329 = vmul.f32 %v242, %v242
    %v330 = vmul.f32 %v245, %v245
    %v331 = vsel %vm126, %v315, 0.0
    %332 = vadd.xlane.f32.xlu0 %v331
    %v333 = vpop.xlane.xlu0 %332
    %v334 = vsel %vm126, %v316, 0.0
    %335 = vadd.xlane.f32.xlu0 %v334
    %v336 = vpop.xlane.xlu0 %335
    %v337 = vsel %vm126, %v317, 0.0
    %338 = vadd.xlane.f32.xlu0 %v337
    %v339 = vpop.xlane.xlu0 %338
    %v340 = vsel %vm126, %v318, 0.0
    %341 = vadd.xlane.f32.xlu0 %v340
    %v342 = vpop.xlane.xlu0 %341
    %v343 = vsel %vm126, %v319, 0.0
    %344 = vadd.xlane.f32.xlu0 %v343
    %v345 = vpop.xlane.xlu0 %344
    %v346 = vsel %vm126, %v320, 0.0
    %347 = vadd.xlane.f32.xlu0 %v346
    %v348 = vpop.xlane.xlu0 %347
    %v349 = vsel %vm126, %v321, 0.0
    %350 = vadd.xlane.f32.xlu0 %v349
    %v351 = vpop.xlane.xlu0 %350
    %v352 = vsel %vm126, %v322, 0.0
    %353 = vadd.xlane.f32.xlu0 %v352
    %v354 = vpop.xlane.xlu0 %353
    %v355 = vsel %vm126, %v323, 0.0
    %356 = vadd.xlane.f32.xlu0 %v355
    %v357 = vpop.xlane.xlu0 %356
    %v358 = vsel %vm126, %v324, 0.0
    %359 = vadd.xlane.f32.xlu0 %v358
    %v360 = vpop.xlane.xlu0 %359
    %v361 = vsel %vm126, %v325, 0.0
    %362 = vadd.xlane.f32.xlu0 %v361
    %v363 = vpop.xlane.xlu0 %362
    %v364 = vsel %vm126, %v326, 0.0
    %365 = vadd.xlane.f32.xlu0 %v364
    %v366 = vpop.xlane.xlu0 %365
    %v367 = vsel %vm126, %v327, 0.0
    %368 = vadd.xlane.f32.xlu0 %v367
    %v369 = vpop.xlane.xlu0 %368
    %v370 = vsel %vm126, %v328, 0.0
    %371 = vadd.xlane.f32.xlu0 %v370
    %v372 = vpop.xlane.xlu0 %371
    %v373 = vsel %vm126, %v329, 0.0
    %374 = vadd.xlane.f32.xlu0 %v373
    %v375 = vpop.xlane.xlu0 %374
    %v376 = vsel %vm126, %v330, 0.0
    %377 = vadd.xlane.f32.xlu0 %v376
    %v378 = vpop.xlane.xlu0 %377
    %v379 = vmul.f32 %v333, %v298
    %v380 = vmul.f32 %v336, %v298
    %v381 = vmul.f32 %v339, %v298
    %v382 = vmul.f32 %v342, %v298
    %v383 = vmul.f32 %v345, %v298
    %v384 = vmul.f32 %v348, %v298
    %v385 = vmul.f32 %v351, %v298
    %v386 = vmul.f32 %v354, %v298
    %v387 = vmul.f32 %v357, %v298
    %v388 = vmul.f32 %v360, %v298
    %v389 = vmul.f32 %v363, %v298
    %v390 = vmul.f32 %v366, %v298
    %v391 = vmul.f32 %v369, %v298
    %v392 = vmul.f32 %v372, %v298
    %v393 = vmul.f32 %v375, %v298
    %v394 = vmul.f32 %v378, %v298
    %v395 = vmul.f32 %v299, %v299
    %v396 = vmul.f32 %v300, %v300
    %v397 = vmul.f32 %v301, %v301
    %v398 = vmul.f32 %v302, %v302
    %v399 = vmul.f32 %v303, %v303
    %v400 = vmul.f32 %v304, %v304
    %v401 = vmul.f32 %v305, %v305
    %v402 = vmul.f32 %v306, %v306
    %v403 = vmul.f32 %v307, %v307
    %v404 = vmul.f32 %v308, %v308
    %v405 = vmul.f32 %v309, %v309
    %v406 = vmul.f32 %v310, %v310
    %v407 = vmul.f32 %v311, %v311
    %v408 = vmul.f32 %v312, %v312
    %v409 = vmul.f32 %v313, %v313
    %v410 = vmul.f32 %v314, %v314
    %v411 = vsub.f32 %v379, %v395
    %v412 = vsub.f32 %v380, %v396
    %v413 = vsub.f32 %v381, %v397
    %v414 = vsub.f32 %v382, %v398
    %v415 = vsub.f32 %v383, %v399
    %v416 = vsub.f32 %v384, %v400
    %v417 = vsub.f32 %v385, %v401
    %v418 = vsub.f32 %v386, %v402
    %v419 = vsub.f32 %v387, %v403
    %v420 = vsub.f32 %v388, %v404
    %v421 = vsub.f32 %v389, %v405
    %v422 = vsub.f32 %v390, %v406
    %v423 = vsub.f32 %v391, %v407
    %v424 = vsub.f32 %v392, %v408
    %v425 = vsub.f32 %v393, %v409
    %v426 = vsub.f32 %v394, %v410
    %v427 = vmax.f32 %v411, 0.0
    %v428 = vmax.f32 %v412, 0.0
    %v429 = vmax.f32 %v413, 0.0
    %v430 = vmax.f32 %v414, 0.0
    %v431 = vmax.f32 %v415, 0.0
    %v432 = vmax.f32 %v416, 0.0
    %v433 = vmax.f32 %v417, 0.0
    %v434 = vmax.f32 %v418, 0.0
    %v435 = vmax.f32 %v419, 0.0
    %v436 = vmax.f32 %v420, 0.0
    %v437 = vmax.f32 %v421, 0.0
    %v438 = vmax.f32 %v422, 0.0
    %v439 = vmax.f32 %v423, 0.0
    %v440 = vmax.f32 %v424, 0.0
    %v441 = vmax.f32 %v425, 0.0
    %v442 = vmax.f32 %v426, 0.0
    %v443 = vsub.f32 %v186, %v299
    %v444 = vsub.f32 %v189, %v300
    %v445 = vsub.f32 %v194, %v301
    %v446 = vsub.f32 %v197, %v302
    %v447 = vsub.f32 %v202, %v303
    %v448 = vsub.f32 %v205, %v304
    %v449 = vsub.f32 %v210, %v305
    %v450 = vsub.f32 %v213, %v306
    %v451 = vsub.f32 %v218, %v307
    %v452 = vsub.f32 %v221, %v308
    %v453 = vsub.f32 %v226, %v309
    %v454 = vsub.f32 %v229, %v310
    %v455 = vsub.f32 %v234, %v311
    %v456 = vsub.f32 %v237, %v312
    %v457 = vsub.f32 %v242, %v313
    %v458 = vsub.f32 %v245, %v314
    %v459 = vadd.f32 %v427, 1e-05
    %v460 = vadd.f32 %v428, 1e-05
    %v461 = vadd.f32 %v429, 1e-05
    %v462 = vadd.f32 %v430, 1e-05
    %v463 = vadd.f32 %v431, 1e-05
    %v464 = vadd.f32 %v432, 1e-05
    %v465 = vadd.f32 %v433, 1e-05
    %v466 = vadd.f32 %v434, 1e-05
    %v467 = vadd.f32 %v435, 1e-05
    %v468 = vadd.f32 %v436, 1e-05
    %v469 = vadd.f32 %v437, 1e-05
    %v470 = vadd.f32 %v438, 1e-05
    %v471 = vadd.f32 %v439, 1e-05
    %v472 = vadd.f32 %v440, 1e-05
    %v473 = vadd.f32 %v441, 1e-05
    %v474 = vadd.f32 %v442, 1e-05
    %v475 = vrsqrt.pop %v459
    %v476 = vrsqrt.pop %v460
    %v477 = vrsqrt.pop %v461
    %v478 = vrsqrt.pop %v462
    %v479 = vrsqrt.pop %v463
    %v480 = vrsqrt.pop %v464
    %v481 = vrsqrt.pop %v465
    %v482 = vrsqrt.pop %v466
    %v483 = vrsqrt.pop %v467
    %v484 = vrsqrt.pop %v468
    %v485 = vrsqrt.pop %v469
    %v486 = vrsqrt.pop %v470
    %v487 = vrsqrt.pop %v471
    %v488 = vrsqrt.pop %v472
    %v489 = vrsqrt.pop %v473
    %v490 = vrsqrt.pop %v474
    %v491 = vmul.f32 %v443, %v475
    %v492 = vmul.f32 %v444, %v476
    %v493 = vmul.f32 %v445, %v477
    %v494 = vmul.f32 %v446, %v478
    %v495 = vmul.f32 %v447, %v479
    %v496 = vmul.f32 %v448, %v480
    %v497 = vmul.f32 %v449, %v481
    %v498 = vmul.f32 %v450, %v482
    %v499 = vmul.f32 %v451, %v483
    %v500 = vmul.f32 %v452, %v484
    %v501 = vmul.f32 %v453, %v485
    %v502 = vmul.f32 %v454, %v486
    %v503 = vmul.f32 %v455, %v487
    %v504 = vmul.f32 %v456, %v488
    %v505 = vmul.f32 %v457, %v489
    %v506 = vmul.f32 %v458, %v490
    %v507 = vlaneseq
    %v508 = vshrl.u32 %v507, 7
    %v509 = vsub.s32 0, %v508
    %v510 = vrot.slane %v248, %v509
    %v511 = vmul.f32 %v491, %v510
    %v512 = vmul.f32 %v492, %v510
    %v513 = vmul.f32 %v493, %v510
    %v514 = vmul.f32 %v494, %v510
    %v515 = vmul.f32 %v495, %v510
    %v516 = vmul.f32 %v496, %v510
    %v517 = vmul.f32 %v497, %v510
    %v518 = vmul.f32 %v498, %v510
    %v519 = vmul.f32 %v499, %v510
    %v520 = vmul.f32 %v500, %v510
    %v521 = vmul.f32 %v501, %v510
    %v522 = vmul.f32 %v502, %v510
    %v523 = vmul.f32 %v503, %v510
    %v524 = vmul.f32 %v504, %v510
    %v525 = vmul.f32 %v505, %v510
    %v526 = vmul.f32 %v506, %v510
    %v527 = vlaneseq
    %v528 = vshrl.u32 %v527, 7
    %v529 = vsub.s32 0, %v528
    %v530 = vrot.slane %v249, %v529
    %v531 = vadd.f32 %v511, %v530
    %v532 = vadd.f32 %v512, %v530
    %v533 = vadd.f32 %v513, %v530
    %v534 = vadd.f32 %v514, %v530
    %v535 = vadd.f32 %v515, %v530
    %v536 = vadd.f32 %v516, %v530
    %v537 = vadd.f32 %v517, %v530
    %v538 = vadd.f32 %v518, %v530
    %v539 = vadd.f32 %v519, %v530
    %v540 = vadd.f32 %v520, %v530
    %v541 = vadd.f32 %v521, %v530
    %v542 = vadd.f32 %v522, %v530
    %v543 = vadd.f32 %v523, %v530
    %v544 = vadd.f32 %v524, %v530
    %v545 = vadd.f32 %v525, %v530
    %v546 = vadd.f32 %v526, %v530
    %v547 = vmul.f32 %v531, 0.5
    %v548 = vmul.f32 %v532, 0.5
    %v549 = vmul.f32 %v533, 0.5
    %v550 = vmul.f32 %v534, 0.5
    %v551 = vmul.f32 %v535, 0.5
    %v552 = vmul.f32 %v536, 0.5
    %v553 = vmul.f32 %v537, 0.5
    %v554 = vmul.f32 %v538, 0.5
    %v555 = vmul.f32 %v539, 0.5
    %v556 = vmul.f32 %v540, 0.5
    %v557 = vmul.f32 %v541, 0.5
    %v558 = vmul.f32 %v542, 0.5
    %v559 = vmul.f32 %v543, 0.5
    %v560 = vmul.f32 %v544, 0.5
    %v561 = vmul.f32 %v545, 0.5
    %v562 = vmul.f32 %v546, 0.5
    %v563 = vtanh.pop %v547
    %v564 = vtanh.pop %v548
    %v565 = vtanh.pop %v549
    %v566 = vtanh.pop %v550
    %v567 = vtanh.pop %v551
    %v568 = vtanh.pop %v552
    %v569 = vtanh.pop %v553
    %v570 = vtanh.pop %v554
    %v571 = vtanh.pop %v555
    %v572 = vtanh.pop %v556
    %v573 = vtanh.pop %v557
    %v574 = vtanh.pop %v558
    %v575 = vtanh.pop %v559
    %v576 = vtanh.pop %v560
    %v577 = vtanh.pop %v561
    %v578 = vtanh.pop %v562
    %v579 = vmul.f32 %v563, 0.5
    %v580 = vmul.f32 %v564, 0.5
    %v581 = vmul.f32 %v565, 0.5
    %v582 = vmul.f32 %v566, 0.5
    %v583 = vmul.f32 %v567, 0.5
    %v584 = vmul.f32 %v568, 0.5
    %v585 = vmul.f32 %v569, 0.5
    %v586 = vmul.f32 %v570, 0.5
    %v587 = vmul.f32 %v571, 0.5
    %v588 = vmul.f32 %v572, 0.5
    %v589 = vmul.f32 %v573, 0.5
    %v590 = vmul.f32 %v574, 0.5
    %v591 = vmul.f32 %v575, 0.5
    %v592 = vmul.f32 %v576, 0.5
    %v593 = vmul.f32 %v577, 0.5
    %v594 = vmul.f32 %v578, 0.5
    %v595 = vadd.f32 %v579, 0.5
    %v596 = vadd.f32 %v580, 0.5
    %v597 = vadd.f32 %v581, 0.5
    %v598 = vadd.f32 %v582, 0.5
    %v599 = vadd.f32 %v583, 0.5
    %v600 = vadd.f32 %v584, 0.5
    %v601 = vadd.f32 %v585, 0.5
    %v602 = vadd.f32 %v586, 0.5
    %v603 = vadd.f32 %v587, 0.5
    %v604 = vadd.f32 %v588, 0.5
    %v605 = vadd.f32 %v589, 0.5
    %v606 = vadd.f32 %v590, 0.5
    %v607 = vadd.f32 %v591, 0.5
    %v608 = vadd.f32 %v592, 0.5
    %v609 = vadd.f32 %v593, 0.5
    %v610 = vadd.f32 %v594, 0.5
    %v611 = vmul.f32 %v531, %v595
    %v612 = vmul.f32 %v532, %v596
    %v613 = vmul.f32 %v533, %v597
    %v614 = vmul.f32 %v534, %v598
    %v615 = vmul.f32 %v535, %v599
    %v616 = vmul.f32 %v536, %v600
    %v617 = vmul.f32 %v537, %v601
    %v618 = vmul.f32 %v538, %v602
    %v619 = vmul.f32 %v539, %v603
    %v620 = vmul.f32 %v540, %v604
    %v621 = vmul.f32 %v541, %v605
    %v622 = vmul.f32 %v542, %v606
    %v623 = vmul.f32 %v543, %v607
    %v624 = vmul.f32 %v544, %v608
    %v625 = vmul.f32 %v545, %v609
    %v626 = vmul.f32 %v546, %v610
    %v627 = vpack.c.bf16 %v612, %v611
    %v628 = vpack.c.bf16 %v614, %v613
    %v629 = vpack.c.bf16 %v616, %v615
    %v630 = vpack.c.bf16 %v618, %v617
    %v631 = vpack.c.bf16 %v620, %v619
    %v632 = vpack.c.bf16 %v622, %v621
    %v633 = vpack.c.bf16 %v624, %v623
    %v634 = vpack.c.bf16 %v626, %v625
    %v635 = vld [vmem:[#allocation8] sm:$0xf]
    %v636 = vld [vmem:[#allocation8 + $0x4] sm:$0xf]
    %v637 = vld [vmem:[#allocation8 + $0x8] sm:$0xf]
    %v638 = vld [vmem:[#allocation8 + $0xc] sm:$0xf]
    %v639 = vld [vmem:[%s4] sm:$0x1]
    %v640 = vlaneseq
    %v641 = vshrl.u32 %v640, 7
    %v642 = vsub.s32 0, %v641
    %v643 = vrot.slane %v639, %v642
    %v648 = vunpack.c.l.b16 %v635
    %v649 = vunpack.c.l.b16 %v636
    %v650 = vunpack.c.l.b16 %v637
    %v651 = vunpack.c.l.b16 %v638
    %v652 = vpack.c.b16 %v649, %v648
    %v653 = vpack.c.b16 %v651, %v650
    %v657 = vsel %vm126, %v627, 0
    %v660 = vsel %vm126, %v628, 0
    %v663 = vsel %vm126, %v629, 0
    %v666 = vsel %vm126, %v630, 0
    %v669 = vsel %vm126, %v631, 0
    %v672 = vsel %vm126, %v632, 0
    %v675 = vsel %vm126, %v633, 0
    %v678 = vsel %vm126, %v634, 0
    %680 = vmatprep.subr.bf16.mxu0 0
    %681 = vmatpush1.bf16.msra.mxu0 0
    %682 = vmatprep.subr.bf16.mxu0 0
    %683 = vmatpush1.bf16.msra.mxu0 0
    %684 = vmatprep.subr.bf16.mxu0 0
    %685 = vmatpush1.bf16.msra.mxu0 0
    %686 = vmatprep.subr.bf16.mxu0 0
    %687 = vmatpush1.bf16.msra.mxu0 0
    %688 = vmatprep.subr.bf16.mxu0 0
    %689 = vmatpush1.bf16.msra.mxu0 0
    %690 = vmatprep.subr.bf16.mxu0 0
    %691 = vmatpush1.bf16.msra.mxu0 0
    %692 = vmatprep.subr.bf16.mxu0 0
    %693 = vmatpush1.bf16.msra.mxu0 %v653
    %694 = vmatprep.subr.bf16.mxu0 0
    %695 = vmatpush1.bf16.msra.mxu0 %v652
    %696 = vmatprep.subr.bf16.mxu0 0
    %697 = vmatpush2.bf16.msra.mxu0 0
    %698 = vmatprep.subr.bf16.mxu0 0
    %699 = vmatpush2.bf16.msra.mxu0 0
    %700 = vmatprep.subr.bf16.mxu0 0
    %701 = vmatpush2.bf16.msra.mxu0 0
    %702 = vmatprep.subr.bf16.mxu0 0
    %703 = vmatpush2.bf16.msra.mxu0 0
    %704 = vmatprep.subr.bf16.mxu0 0
    %705 = vmatpush2.bf16.msra.mxu0 0
    %706 = vmatprep.subr.bf16.mxu0 0
    %707 = vmatpush2.bf16.msra.mxu0 0
    %708 = vmatprep.subr.bf16.mxu0 0
    %709 = vmatpush2.bf16.msra.mxu0 0
    %710 = vmatprep.subr.bf16.mxu0 0
    %711 = vmatpush2.bf16.msra.mxu0 0
    %712 = vmatprep.mubr.bf16.mxu0 0
    %713 = vmatmul.mubr.bf16.gmra.mxu0 %v657
    %v714 = vpop.f32.mrf.mxu0
    %v715 = vadd.f32 %v643, %v714
    %v716 = vpop.f32.mrf.mxu0
    %v717 = vpop.f32.mrf.mxu0
    %v718 = vadd.f32 %v643, %v717
    %v719 = vpop.f32.mrf.mxu0
    %720 = vmatprep.mubr.bf16.mxu0 0
    %721 = vmatmul.mubr.bf16.gmra.mxu0 %v660
    %v722 = vpop.f32.mrf.mxu0
    %v723 = vadd.f32 %v643, %v722
    %v724 = vpop.f32.mrf.mxu0
    %v725 = vpop.f32.mrf.mxu0
    %v726 = vadd.f32 %v643, %v725
    %v727 = vpop.f32.mrf.mxu0
    %728 = vmatprep.mubr.bf16.mxu0 0
    %729 = vmatmul.mubr.bf16.gmra.mxu0 %v663
    %v730 = vpop.f32.mrf.mxu0
    %v731 = vadd.f32 %v643, %v730
    %v732 = vpop.f32.mrf.mxu0
    %v733 = vpop.f32.mrf.mxu0
    %v734 = vadd.f32 %v643, %v733
    %v735 = vpop.f32.mrf.mxu0
    %736 = vmatprep.mubr.bf16.mxu0 0
    %737 = vmatmul.mubr.bf16.gmra.mxu0 %v666
    %v738 = vpop.f32.mrf.mxu0
    %v739 = vadd.f32 %v643, %v738
    %v740 = vpop.f32.mrf.mxu0
    %v741 = vpop.f32.mrf.mxu0
    %v742 = vadd.f32 %v643, %v741
    %v743 = vpop.f32.mrf.mxu0
    %744 = vmatprep.mubr.bf16.mxu0 0
    %745 = vmatmul.mubr.bf16.gmra.mxu0 %v669
    %v746 = vpop.f32.mrf.mxu0
    %v747 = vadd.f32 %v643, %v746
    %v748 = vpop.f32.mrf.mxu0
    %v749 = vpop.f32.mrf.mxu0
    %v750 = vadd.f32 %v643, %v749
    %v751 = vpop.f32.mrf.mxu0
    %752 = vmatprep.mubr.bf16.mxu0 0
    %753 = vmatmul.mubr.bf16.gmra.mxu0 %v672
    %v754 = vpop.f32.mrf.mxu0
    %v755 = vadd.f32 %v643, %v754
    %v756 = vpop.f32.mrf.mxu0
    %v757 = vpop.f32.mrf.mxu0
    %v758 = vadd.f32 %v643, %v757
    %v759 = vpop.f32.mrf.mxu0
    %760 = vmatprep.mubr.bf16.mxu0 0
    %761 = vmatmul.mubr.bf16.gmra.mxu0 %v675
    %v762 = vpop.f32.mrf.mxu0
    %v763 = vadd.f32 %v643, %v762
    %v764 = vpop.f32.mrf.mxu0
    %v765 = vpop.f32.mrf.mxu0
    %v766 = vadd.f32 %v643, %v765
    %v767 = vpop.f32.mrf.mxu0
    %768 = vmatprep.mubr.bf16.mxu0 0
    %769 = vmatmul.mubr.bf16.gmra.mxu0 %v678
    %v770 = vpop.f32.mrf.mxu0
    %v771 = vadd.f32 %v643, %v770
    %v772 = vpop.f32.mrf.mxu0
    %v773 = vpop.f32.mrf.mxu0
    %v774 = vadd.f32 %v643, %v773
    %v775 = vpop.f32.mrf.mxu0
    %776 = vdwg.mxu0
    %v777 = vld [vmem:[%s4 + $0x1] sm:$0x1]
    %v778 = vld [vmem:[%s4 + $0x2] sm:$0x1]
    %v779 = vsel %vm126, %v715, 0.0
    %780 = vadd.xlane.f32.xlu0 %v779
    %v781 = vpop.xlane.xlu0 %780
    %v782 = vsel %vm126, %v718, 0.0
    %783 = vadd.xlane.f32.xlu0 %v782
    %v784 = vpop.xlane.xlu0 %783
    %v785 = vsel %vm126, %v723, 0.0
    %786 = vadd.xlane.f32.xlu0 %v785
    %v787 = vpop.xlane.xlu0 %786
    %v788 = vsel %vm126, %v726, 0.0
    %789 = vadd.xlane.f32.xlu0 %v788
    %v790 = vpop.xlane.xlu0 %789
    %v791 = vsel %vm126, %v731, 0.0
    %792 = vadd.xlane.f32.xlu0 %v791
    %v793 = vpop.xlane.xlu0 %792
    %v794 = vsel %vm126, %v734, 0.0
    %795 = vadd.xlane.f32.xlu0 %v794
    %v796 = vpop.xlane.xlu0 %795
    %v797 = vsel %vm126, %v739, 0.0
    %798 = vadd.xlane.f32.xlu0 %v797
    %v799 = vpop.xlane.xlu0 %798
    %v800 = vsel %vm126, %v742, 0.0
    %801 = vadd.xlane.f32.xlu0 %v800
    %v802 = vpop.xlane.xlu0 %801
    %v803 = vsel %vm126, %v747, 0.0
    %804 = vadd.xlane.f32.xlu0 %v803
    %v805 = vpop.xlane.xlu0 %804
    %v806 = vsel %vm126, %v750, 0.0
    %807 = vadd.xlane.f32.xlu0 %v806
    %v808 = vpop.xlane.xlu0 %807
    %v809 = vsel %vm126, %v755, 0.0
    %810 = vadd.xlane.f32.xlu0 %v809
    %v811 = vpop.xlane.xlu0 %810
    %v812 = vsel %vm126, %v758, 0.0
    %813 = vadd.xlane.f32.xlu0 %v812
    %v814 = vpop.xlane.xlu0 %813
    %v815 = vsel %vm126, %v763, 0.0
    %816 = vadd.xlane.f32.xlu0 %v815
    %v817 = vpop.xlane.xlu0 %816
    %v818 = vsel %vm126, %v766, 0.0
    %819 = vadd.xlane.f32.xlu0 %v818
    %v820 = vpop.xlane.xlu0 %819
    %v821 = vsel %vm126, %v771, 0.0
    %822 = vadd.xlane.f32.xlu0 %v821
    %v823 = vpop.xlane.xlu0 %822
    %v824 = vsel %vm126, %v774, 0.0
    %825 = vadd.xlane.f32.xlu0 %v824
    %v826 = vpop.xlane.xlu0 %825
    %v827 = vmul.f32 %v781, %v298
    %v828 = vmul.f32 %v784, %v298
    %v829 = vmul.f32 %v787, %v298
    %v830 = vmul.f32 %v790, %v298
    %v831 = vmul.f32 %v793, %v298
    %v832 = vmul.f32 %v796, %v298
    %v833 = vmul.f32 %v799, %v298
    %v834 = vmul.f32 %v802, %v298
    %v835 = vmul.f32 %v805, %v298
    %v836 = vmul.f32 %v808, %v298
    %v837 = vmul.f32 %v811, %v298
    %v838 = vmul.f32 %v814, %v298
    %v839 = vmul.f32 %v817, %v298
    %v840 = vmul.f32 %v820, %v298
    %v841 = vmul.f32 %v823, %v298
    %v842 = vmul.f32 %v826, %v298
    %v843 = vmul.f32 %v715, %v715
    %v844 = vmul.f32 %v718, %v718
    %v845 = vmul.f32 %v723, %v723
    %v846 = vmul.f32 %v726, %v726
    %v847 = vmul.f32 %v731, %v731
    %v848 = vmul.f32 %v734, %v734
    %v849 = vmul.f32 %v739, %v739
    %v850 = vmul.f32 %v742, %v742
    %v851 = vmul.f32 %v747, %v747
    %v852 = vmul.f32 %v750, %v750
    %v853 = vmul.f32 %v755, %v755
    %v854 = vmul.f32 %v758, %v758
    %v855 = vmul.f32 %v763, %v763
    %v856 = vmul.f32 %v766, %v766
    %v857 = vmul.f32 %v771, %v771
    %v858 = vmul.f32 %v774, %v774
    %v859 = vsel %vm126, %v843, 0.0
    %860 = vadd.xlane.f32.xlu0 %v859
    %v861 = vpop.xlane.xlu0 %860
    %v862 = vsel %vm126, %v844, 0.0
    %863 = vadd.xlane.f32.xlu0 %v862
    %v864 = vpop.xlane.xlu0 %863
    %v865 = vsel %vm126, %v845, 0.0
    %866 = vadd.xlane.f32.xlu0 %v865
    %v867 = vpop.xlane.xlu0 %866
    %v868 = vsel %vm126, %v846, 0.0
    %869 = vadd.xlane.f32.xlu0 %v868
    %v870 = vpop.xlane.xlu0 %869
    %v871 = vsel %vm126, %v847, 0.0
    %872 = vadd.xlane.f32.xlu0 %v871
    %v873 = vpop.xlane.xlu0 %872
    %v874 = vsel %vm126, %v848, 0.0
    %875 = vadd.xlane.f32.xlu0 %v874
    %v876 = vpop.xlane.xlu0 %875
    %v877 = vsel %vm126, %v849, 0.0
    %878 = vadd.xlane.f32.xlu0 %v877
    %v879 = vpop.xlane.xlu0 %878
    %v880 = vsel %vm126, %v850, 0.0
    %881 = vadd.xlane.f32.xlu0 %v880
    %v882 = vpop.xlane.xlu0 %881
    %v883 = vsel %vm126, %v851, 0.0
    %884 = vadd.xlane.f32.xlu0 %v883
    %v885 = vpop.xlane.xlu0 %884
    %v886 = vsel %vm126, %v852, 0.0
    %887 = vadd.xlane.f32.xlu0 %v886
    %v888 = vpop.xlane.xlu0 %887
    %v889 = vsel %vm126, %v853, 0.0
    %890 = vadd.xlane.f32.xlu0 %v889
    %v891 = vpop.xlane.xlu0 %890
    %v892 = vsel %vm126, %v854, 0.0
    %893 = vadd.xlane.f32.xlu0 %v892
    %v894 = vpop.xlane.xlu0 %893
    %v895 = vsel %vm126, %v855, 0.0
    %896 = vadd.xlane.f32.xlu0 %v895
    %v897 = vpop.xlane.xlu0 %896
    %v898 = vsel %vm126, %v856, 0.0
    %899 = vadd.xlane.f32.xlu0 %v898
    %v900 = vpop.xlane.xlu0 %899
    %v901 = vsel %vm126, %v857, 0.0
    %902 = vadd.xlane.f32.xlu0 %v901
    %v903 = vpop.xlane.xlu0 %902
    %v904 = vsel %vm126, %v858, 0.0
    %905 = vadd.xlane.f32.xlu0 %v904
    %v906 = vpop.xlane.xlu0 %905
    %v907 = vmul.f32 %v861, %v298
    %v908 = vmul.f32 %v864, %v298
    %v909 = vmul.f32 %v867, %v298
    %v910 = vmul.f32 %v870, %v298
    %v911 = vmul.f32 %v873, %v298
    %v912 = vmul.f32 %v876, %v298
    %v913 = vmul.f32 %v879, %v298
    %v914 = vmul.f32 %v882, %v298
    %v915 = vmul.f32 %v885, %v298
    %v916 = vmul.f32 %v888, %v298
    %v917 = vmul.f32 %v891, %v298
    %v918 = vmul.f32 %v894, %v298
    %v919 = vmul.f32 %v897, %v298
    %v920 = vmul.f32 %v900, %v298
    %v921 = vmul.f32 %v903, %v298
    %v922 = vmul.f32 %v906, %v298
    %v923 = vmul.f32 %v827, %v827
    %v924 = vmul.f32 %v828, %v828
    %v925 = vmul.f32 %v829, %v829
    %v926 = vmul.f32 %v830, %v830
    %v927 = vmul.f32 %v831, %v831
    %v928 = vmul.f32 %v832, %v832
    %v929 = vmul.f32 %v833, %v833
    %v930 = vmul.f32 %v834, %v834
    %v931 = vmul.f32 %v835, %v835
    %v932 = vmul.f32 %v836, %v836
    %v933 = vmul.f32 %v837, %v837
    %v934 = vmul.f32 %v838, %v838
    %v935 = vmul.f32 %v839, %v839
    %v936 = vmul.f32 %v840, %v840
    %v937 = vmul.f32 %v841, %v841
    %v938 = vmul.f32 %v842, %v842
    %v939 = vsub.f32 %v907, %v923
    %v940 = vsub.f32 %v908, %v924
    %v941 = vsub.f32 %v909, %v925
    %v942 = vsub.f32 %v910, %v926
    %v943 = vsub.f32 %v911, %v927
    %v944 = vsub.f32 %v912, %v928
    %v945 = vsub.f32 %v913, %v929
    %v946 = vsub.f32 %v914, %v930
    %v947 = vsub.f32 %v915, %v931
    %v948 = vsub.f32 %v916, %v932
    %v949 = vsub.f32 %v917, %v933
    %v950 = vsub.f32 %v918, %v934
    %v951 = vsub.f32 %v919, %v935
    %v952 = vsub.f32 %v920, %v936
    %v953 = vsub.f32 %v921, %v937
    %v954 = vsub.f32 %v922, %v938
    %v955 = vmax.f32 %v939, 0.0
    %v956 = vmax.f32 %v940, 0.0
    %v957 = vmax.f32 %v941, 0.0
    %v958 = vmax.f32 %v942, 0.0
    %v959 = vmax.f32 %v943, 0.0
    %v960 = vmax.f32 %v944, 0.0
    %v961 = vmax.f32 %v945, 0.0
    %v962 = vmax.f32 %v946, 0.0
    %v963 = vmax.f32 %v947, 0.0
    %v964 = vmax.f32 %v948, 0.0
    %v965 = vmax.f32 %v949, 0.0
    %v966 = vmax.f32 %v950, 0.0
    %v967 = vmax.f32 %v951, 0.0
    %v968 = vmax.f32 %v952, 0.0
    %v969 = vmax.f32 %v953, 0.0
    %v970 = vmax.f32 %v954, 0.0
    %v971 = vsub.f32 %v715, %v827
    %v972 = vsub.f32 %v718, %v828
    %v973 = vsub.f32 %v723, %v829
    %v974 = vsub.f32 %v726, %v830
    %v975 = vsub.f32 %v731, %v831
    %v976 = vsub.f32 %v734, %v832
    %v977 = vsub.f32 %v739, %v833
    %v978 = vsub.f32 %v742, %v834
    %v979 = vsub.f32 %v747, %v835
    %v980 = vsub.f32 %v750, %v836
    %v981 = vsub.f32 %v755, %v837
    %v982 = vsub.f32 %v758, %v838
    %v983 = vsub.f32 %v763, %v839
    %v984 = vsub.f32 %v766, %v840
    %v985 = vsub.f32 %v771, %v841
    %v986 = vsub.f32 %v774, %v842
    %v987 = vadd.f32 %v955, 1e-05
    %v988 = vadd.f32 %v956, 1e-05
    %v989 = vadd.f32 %v957, 1e-05
    %v990 = vadd.f32 %v958, 1e-05
    %v991 = vadd.f32 %v959, 1e-05
    %v992 = vadd.f32 %v960, 1e-05
    %v993 = vadd.f32 %v961, 1e-05
    %v994 = vadd.f32 %v962, 1e-05
    %v995 = vadd.f32 %v963, 1e-05
    %v996 = vadd.f32 %v964, 1e-05
    %v997 = vadd.f32 %v965, 1e-05
    %v998 = vadd.f32 %v966, 1e-05
    %v999 = vadd.f32 %v967, 1e-05
    %v1000 = vadd.f32 %v968, 1e-05
    %v1001 = vadd.f32 %v969, 1e-05
    %v1002 = vadd.f32 %v970, 1e-05
    %v1003 = vrsqrt.pop %v987
    %v1004 = vrsqrt.pop %v988
    %v1005 = vrsqrt.pop %v989
    %v1006 = vrsqrt.pop %v990
    %v1007 = vrsqrt.pop %v991
    %v1008 = vrsqrt.pop %v992
    %v1009 = vrsqrt.pop %v993
    %v1010 = vrsqrt.pop %v994
    %v1011 = vrsqrt.pop %v995
    %v1012 = vrsqrt.pop %v996
    %v1013 = vrsqrt.pop %v997
    %v1014 = vrsqrt.pop %v998
    %v1015 = vrsqrt.pop %v999
    %v1016 = vrsqrt.pop %v1000
    %v1017 = vrsqrt.pop %v1001
    %v1018 = vrsqrt.pop %v1002
    %v1019 = vmul.f32 %v971, %v1003
    %v1020 = vmul.f32 %v972, %v1004
    %v1021 = vmul.f32 %v973, %v1005
    %v1022 = vmul.f32 %v974, %v1006
    %v1023 = vmul.f32 %v975, %v1007
    %v1024 = vmul.f32 %v976, %v1008
    %v1025 = vmul.f32 %v977, %v1009
    %v1026 = vmul.f32 %v978, %v1010
    %v1027 = vmul.f32 %v979, %v1011
    %v1028 = vmul.f32 %v980, %v1012
    %v1029 = vmul.f32 %v981, %v1013
    %v1030 = vmul.f32 %v982, %v1014
    %v1031 = vmul.f32 %v983, %v1015
    %v1032 = vmul.f32 %v984, %v1016
    %v1033 = vmul.f32 %v985, %v1017
    %v1034 = vmul.f32 %v986, %v1018
    %v1035 = vlaneseq
    %v1036 = vshrl.u32 %v1035, 7
    %v1037 = vsub.s32 0, %v1036
    %v1038 = vrot.slane %v777, %v1037
    %v1039 = vmul.f32 %v1019, %v1038
    %v1040 = vmul.f32 %v1020, %v1038
    %v1041 = vmul.f32 %v1021, %v1038
    %v1042 = vmul.f32 %v1022, %v1038
    %v1043 = vmul.f32 %v1023, %v1038
    %v1044 = vmul.f32 %v1024, %v1038
    %v1045 = vmul.f32 %v1025, %v1038
    %v1046 = vmul.f32 %v1026, %v1038
    %v1047 = vmul.f32 %v1027, %v1038
    %v1048 = vmul.f32 %v1028, %v1038
    %v1049 = vmul.f32 %v1029, %v1038
    %v1050 = vmul.f32 %v1030, %v1038
    %v1051 = vmul.f32 %v1031, %v1038
    %v1052 = vmul.f32 %v1032, %v1038
    %v1053 = vmul.f32 %v1033, %v1038
    %v1054 = vmul.f32 %v1034, %v1038
    %v1055 = vlaneseq
    %v1056 = vshrl.u32 %v1055, 7
    %v1057 = vsub.s32 0, %v1056
    %v1058 = vrot.slane %v778, %v1057
    %v1059 = vadd.f32 %v1039, %v1058
    %v1060 = vadd.f32 %v1040, %v1058
    %v1061 = vadd.f32 %v1041, %v1058
    %v1062 = vadd.f32 %v1042, %v1058
    %v1063 = vadd.f32 %v1043, %v1058
    %v1064 = vadd.f32 %v1044, %v1058
    %v1065 = vadd.f32 %v1045, %v1058
    %v1066 = vadd.f32 %v1046, %v1058
    %v1067 = vadd.f32 %v1047, %v1058
    %v1068 = vadd.f32 %v1048, %v1058
    %v1069 = vadd.f32 %v1049, %v1058
    %v1070 = vadd.f32 %v1050, %v1058
    %v1071 = vadd.f32 %v1051, %v1058
    %v1072 = vadd.f32 %v1052, %v1058
    %v1073 = vadd.f32 %v1053, %v1058
    %v1074 = vadd.f32 %v1054, %v1058
    %v1075 = vmul.f32 %v1059, 0.5
    %v1076 = vmul.f32 %v1060, 0.5
    %v1077 = vmul.f32 %v1061, 0.5
    %v1078 = vmul.f32 %v1062, 0.5
    %v1079 = vmul.f32 %v1063, 0.5
    %v1080 = vmul.f32 %v1064, 0.5
    %v1081 = vmul.f32 %v1065, 0.5
    %v1082 = vmul.f32 %v1066, 0.5
    %v1083 = vmul.f32 %v1067, 0.5
    %v1084 = vmul.f32 %v1068, 0.5
    %v1085 = vmul.f32 %v1069, 0.5
    %v1086 = vmul.f32 %v1070, 0.5
    %v1087 = vmul.f32 %v1071, 0.5
    %v1088 = vmul.f32 %v1072, 0.5
    %v1089 = vmul.f32 %v1073, 0.5
    %v1090 = vmul.f32 %v1074, 0.5
    %v1091 = vtanh.pop %v1075
    %v1092 = vtanh.pop %v1076
    %v1093 = vtanh.pop %v1077
    %v1094 = vtanh.pop %v1078
    %v1095 = vtanh.pop %v1079
    %v1096 = vtanh.pop %v1080
    %v1097 = vtanh.pop %v1081
    %v1098 = vtanh.pop %v1082
    %v1099 = vtanh.pop %v1083
    %v1100 = vtanh.pop %v1084
    %v1101 = vtanh.pop %v1085
    %v1102 = vtanh.pop %v1086
    %v1103 = vtanh.pop %v1087
    %v1104 = vtanh.pop %v1088
    %v1105 = vtanh.pop %v1089
    %v1106 = vtanh.pop %v1090
    %v1107 = vmul.f32 %v1091, 0.5
    %v1108 = vmul.f32 %v1092, 0.5
    %v1109 = vmul.f32 %v1093, 0.5
    %v1110 = vmul.f32 %v1094, 0.5
    %v1111 = vmul.f32 %v1095, 0.5
    %v1112 = vmul.f32 %v1096, 0.5
    %v1113 = vmul.f32 %v1097, 0.5
    %v1114 = vmul.f32 %v1098, 0.5
    %v1115 = vmul.f32 %v1099, 0.5
    %v1116 = vmul.f32 %v1100, 0.5
    %v1117 = vmul.f32 %v1101, 0.5
    %v1118 = vmul.f32 %v1102, 0.5
    %v1119 = vmul.f32 %v1103, 0.5
    %v1120 = vmul.f32 %v1104, 0.5
    %v1121 = vmul.f32 %v1105, 0.5
    %v1122 = vmul.f32 %v1106, 0.5
    %v1123 = vadd.f32 %v1107, 0.5
    %v1124 = vadd.f32 %v1108, 0.5
    %v1125 = vadd.f32 %v1109, 0.5
    %v1126 = vadd.f32 %v1110, 0.5
    %v1127 = vadd.f32 %v1111, 0.5
    %v1128 = vadd.f32 %v1112, 0.5
    %v1129 = vadd.f32 %v1113, 0.5
    %v1130 = vadd.f32 %v1114, 0.5
    %v1131 = vadd.f32 %v1115, 0.5
    %v1132 = vadd.f32 %v1116, 0.5
    %v1133 = vadd.f32 %v1117, 0.5
    %v1134 = vadd.f32 %v1118, 0.5
    %v1135 = vadd.f32 %v1119, 0.5
    %v1136 = vadd.f32 %v1120, 0.5
    %v1137 = vadd.f32 %v1121, 0.5
    %v1138 = vadd.f32 %v1122, 0.5
    %v1139 = vmul.f32 %v1059, %v1123
    %v1140 = vmul.f32 %v1060, %v1124
    %v1141 = vmul.f32 %v1061, %v1125
    %v1142 = vmul.f32 %v1062, %v1126
    %v1143 = vmul.f32 %v1063, %v1127
    %v1144 = vmul.f32 %v1064, %v1128
    %v1145 = vmul.f32 %v1065, %v1129
    %v1146 = vmul.f32 %v1066, %v1130
    %v1147 = vmul.f32 %v1067, %v1131
    %v1148 = vmul.f32 %v1068, %v1132
    %v1149 = vmul.f32 %v1069, %v1133
    %v1150 = vmul.f32 %v1070, %v1134
    %v1151 = vmul.f32 %v1071, %v1135
    %v1152 = vmul.f32 %v1072, %v1136
    %v1153 = vmul.f32 %v1073, %v1137
    %v1154 = vmul.f32 %v1074, %v1138
    %v1155 = vld [vmem:[%s5] sm:$0x1]
    %v1156 = vpack.c.bf16 %v1140, %v1139
    %v1157 = vpack.c.bf16 %v1142, %v1141
    %v1158 = vpack.c.bf16 %v1144, %v1143
    %v1159 = vpack.c.bf16 %v1146, %v1145
    %v1160 = vpack.c.bf16 %v1148, %v1147
    %v1161 = vpack.c.bf16 %v1150, %v1149
    %v1162 = vpack.c.bf16 %v1152, %v1151
    %v1163 = vpack.c.bf16 %v1154, %v1153
    %s1164 = sld [smem:[#allocation2]]
    %v1165 = vstv %s1164
    %v1167 = vsel %vm126, %v1155, 0
    %v1170 = vsel %vm126, %v1156, 0
    %v1173 = vsel %vm126, %v1157, 0
    %v1176 = vsel %vm126, %v1158, 0
    %v1179 = vsel %vm126, %v1159, 0
    %v1182 = vsel %vm126, %v1160, 0
    %v1185 = vsel %vm126, %v1161, 0
    %v1188 = vsel %vm126, %v1162, 0
    %v1191 = vsel %vm126, %v1163, 0
    %1193 = vmatprep.subr.bf16.mxu0 0
    %1194 = vmatpush1.bf16.xpose.msra.mxu0 %v1191
    %1195 = vmatprep.subr.bf16.mxu0 0
    %1196 = vmatpush1.bf16.xpose.msra.mxu0 %v1188
    %1197 = vmatprep.subr.bf16.mxu0 0
    %1198 = vmatpush1.bf16.xpose.msra.mxu0 %v1185
    %1199 = vmatprep.subr.bf16.mxu0 0
    %1200 = vmatpush1.bf16.xpose.msra.mxu0 %v1182
    %1201 = vmatprep.subr.bf16.mxu0 0
    %1202 = vmatpush1.bf16.xpose.msra.mxu0 %v1179
    %1203 = vmatprep.subr.bf16.mxu0 0
    %1204 = vmatpush1.bf16.xpose.msra.mxu0 %v1176
    %1205 = vmatprep.subr.bf16.mxu0 0
    %1206 = vmatpush1.bf16.xpose.msra.mxu0 %v1173
    %1207 = vmatprep.subr.bf16.mxu0 0
    %1208 = vmatpush1.bf16.xpose.msra.mxu0 %v1170
    %1209 = vmatprep.subr.bf16.mxu0 0
    %1210 = vmatpush2.bf16.xpose.msra.mxu0 0
    %1211 = vmatprep.subr.bf16.mxu0 0
    %1212 = vmatpush2.bf16.xpose.msra.mxu0 0
    %1213 = vmatprep.subr.bf16.mxu0 0
    %1214 = vmatpush2.bf16.xpose.msra.mxu0 0
    %1215 = vmatprep.subr.bf16.mxu0 0
    %1216 = vmatpush2.bf16.xpose.msra.mxu0 0
    %1217 = vmatprep.subr.bf16.mxu0 0
    %1218 = vmatpush2.bf16.xpose.msra.mxu0 0
    %1219 = vmatprep.subr.bf16.mxu0 0
    %1220 = vmatpush2.bf16.xpose.msra.mxu0 0
    %1221 = vmatprep.subr.bf16.mxu0 0
    %1222 = vmatpush2.bf16.xpose.msra.mxu0 0
    %1223 = vmatprep.subr.bf16.mxu0 0
    %1224 = vmatpush2.bf16.xpose.msra.mxu0 0
    %1225 = vmatprep.mubr.bf16.mxu0 0
    %1226 = vmatmul.mubr.bf16.gmra.mxu0 %v1167
    %v1227 = vpop.f32.mrf.mxu0
    %v1228 = vadd.f32 %v1165, %v1227
    %v1229 = vpop.f32.mrf.mxu0
    %v1230 = vpop.f32.mrf.mxu0
    %v1231 = vpop.f32.mrf.mxu0
    %1232 = vdwg.mxu0
    %1233 = vst [vmem:[%s7] sm:$0x1] %v1228
    // Predicated region
    $region46: #{critic_forward.1} parent=1 // pred_check
      _
    $region47: #{critic_forward.1} parent=1 // pred_check_branch
      %1235 = sbr.rel (0) target = $region49
    $region48: #{critic_forward.1} parent=1 // pred_region
      _
    $region49: #{critic_forward.1} parent=1 // pred_fallthru
      _
    // Predicated region
    $region50: #{critic_forward.1} parent=1 // pred_check
      _
    $region51: #{critic_forward.1} parent=1 // pred_check_branch
      %1237 = sbr.rel (0) target = $region53
    $region52: #{critic_forward.1} parent=1 // pred_region
      _
    $region53: #{critic_forward.1} parent=1 // pred_fallthru
      _
    %1238 = vsyncpa [#allocation4], 1
    %1239 = vsyncpa [#allocation6], 1
    %1240 = vsyncpa [#allocation9], 1

</llo_original>
